<compile_context>
chip_gen: v5e
topology: v5e:2x2
jax: 0.10.0
libtpu: 0.0.40
codegen_flags: <defaults>
</compile_context>

<pallas_src>
import functools

import jax
import jax.numpy as jnp
import numpy as np
from jax.experimental import pallas as pl
from jax.experimental.pallas import tpu as pltpu


# ---------------------------------------------------------------------------
# Kernel 1: tiled y = x @ Wt + b   (Wt is the weight pre-transposed to (K, M))
# ---------------------------------------------------------------------------
def _linear_kernel(x_ref, wt_ref, b_ref, o_ref, acc_ref):
    @pl.when(pl.program_id(2) == 0)
    def _init():
        acc_ref[...] = jnp.zeros_like(acc_ref)

    acc_ref[...] += jnp.dot(x_ref[...], wt_ref[...],
                            preferred_element_type=jnp.float32)

    @pl.when(pl.program_id(2) == pl.num_programs(2) - 1)
    def _finalize():
        o_ref[...] = (acc_ref[...] + b_ref[...].astype(jnp.float32)).astype(o_ref.dtype)


def _pick_reduce_tile(k_dim, cap):
    # Reduction tile must divide K exactly (padding on K would pollute the sum).
    if k_dim <= cap:
        return k_dim
    return cap if k_dim % cap == 0 else k_dim


def pallas_linear(x, wt, b, *, tm=256, tn=256, tk=256):
    """y = x @ wt + b.  x: (N, K); wt: (K, M) already transposed; b: (M,)."""
    N, K = x.shape
    M = wt.shape[1]
    tm = min(tm, N)                  # small dims -> full-dim blocks (always legal)
    tn = min(tn, M)                  # 256 is a multiple of 128 (lane-dense output)
    tk = _pick_reduce_tile(K, tk)
    grid = (pl.cdiv(N, tm), pl.cdiv(M, tn), K // tk)   # reduction axis last
    return pl.pallas_call(
        _linear_kernel,
        out_shape=jax.ShapeDtypeStruct((N, M), x.dtype),
        grid=grid,
        in_specs=[
            pl.BlockSpec((tm, tk), lambda i, j, k: (i, k)),
            pl.BlockSpec((tk, tn), lambda i, j, k: (k, j)),
            pl.BlockSpec((1, tn), lambda i, j, k: (0, j)),
        ],
        out_specs=pl.BlockSpec((tm, tn), lambda i, j, k: (i, j)),
        scratch_shapes=[pltpu.VMEM((tm, tn), jnp.float32)],
        compiler_params=pltpu.CompilerParams(
            dimension_semantics=("parallel", "parallel", "arbitrary")),
    )(x, wt, b.reshape(1, M))


# ---------------------------------------------------------------------------
# Kernel 2: multi-head attention over a group of batch elements.
# Inputs stay in (Time, Batch, Embed) layout (no HBM transposes); all heads of
# the group are processed inside one grid step and the output is written as a
# single lane-dense (T, GB*E) slab.
# ---------------------------------------------------------------------------
def _attn_body(q_ref, k_ref, v_ref, mask_ref, o_ref, o_acc, *,
               scaling, num_heads, head_dim, q_col=0, k_col=0, v_col=0):
    group = q_ref.shape[1]
    E = num_heads * head_dim
    mask = mask_ref[...]                      # (T, S) f32, shared by every head
    for g in range(group):                    # static unroll over batch group
        for h in range(num_heads):            # static unroll over heads
            c = h * head_dim
            qh = q_ref[:, g, q_col + c: q_col + c + head_dim] * scaling   # (T, D)
            kh = k_ref[:, g, k_col + c: k_col + c + head_dim]             # (S, D)
            vh = v_ref[:, g, v_col + c: v_col + c + head_dim]             # (S, D)
            # logits on the MXU; operands stay in the input dtype, accumulate f32.
            s = jax.lax.dot_general(qh, kh, (((1,), (1,)), ((), ())),
                                    preferred_element_type=jnp.float32)   # (T, S)
            s = s + mask
            s = s - jnp.max(s, axis=-1, keepdims=True)
            p = jnp.exp(s)
            denom = jnp.sum(p, axis=-1, keepdims=True)
            r = pl.reciprocal(denom, approx=True)     # EUP seed (free slot)
            r = r * (2.0 - denom * r)                 # one Newton step -> f32 accurate
            p = (p * r).astype(vh.dtype)              # softmax back to input dtype
            o_acc[:, g * E + c: g * E + c + head_dim] = jax.lax.dot_general(
                p, vh, (((1,), (0,)), ((), ())), preferred_element_type=jnp.float32)
    # Single lane-dense store of the whole (T, group*E) slab.
    o_ref[...] = o_acc[...].astype(o_ref.dtype)


def _attn_kernel(q_ref, k_ref, v_ref, mask_ref, o_ref, o_acc, *,
                 scaling, num_heads, head_dim):
    _attn_body(q_ref, k_ref, v_ref, mask_ref, o_ref, o_acc,
               scaling=scaling, num_heads=num_heads, head_dim=head_dim)


def _attn_kernel_fused(qkv_ref, mask_ref, o_ref, o_acc, *,
                       scaling, num_heads, head_dim):
    E = num_heads * head_dim
    _attn_body(qkv_ref, qkv_ref, qkv_ref, mask_ref, o_ref, o_acc,
               scaling=scaling, num_heads=num_heads, head_dim=head_dim,
               q_col=0, k_col=E, v_col=2 * E)


def _attn_batch_group(batch):
    # Batch elements per grid step.  Second-minor block dim must be a multiple
    # of 8 or the full batch; full batch is fine at these sizes.
    if batch <= 8:
        return batch
    for g in (16, 8):
        if batch % g == 0:
            return g
    return batch


def pallas_mha_fused(qkv, attn_mask, *, scaling, num_heads, head_dim):
    """Self-attention. qkv: (T, B, 3E) fused projections; returns (T, B*E)."""
    T, B, three_e = qkv.shape
    E = three_e // 3
    S = T
    GB = _attn_batch_group(B)
    kern = functools.partial(_attn_kernel_fused, scaling=scaling,
                             num_heads=num_heads, head_dim=head_dim)
    return pl.pallas_call(
        kern,
        out_shape=jax.ShapeDtypeStruct((T, B * E), qkv.dtype),
        grid=(B // GB,),
        in_specs=[
            pl.BlockSpec((T, GB, three_e), lambda b: (0, b, 0)),
            pl.BlockSpec((T, S), lambda b: (0, 0)),
        ],
        out_specs=pl.BlockSpec((T, GB * E), lambda b: (0, b)),
        scratch_shapes=[pltpu.VMEM((T, GB * E), jnp.float32)],
        compiler_params=pltpu.CompilerParams(dimension_semantics=("parallel",)),
    )(qkv, attn_mask)


def pallas_mha(q, k, v, attn_mask, *, scaling, num_heads, head_dim):
    """General attention. q: (T, B, E), k/v: (S, B, E); returns (T, B*E)."""
    T, B, E = q.shape
    S = k.shape[0]
    GB = _attn_batch_group(B)
    kern = functools.partial(_attn_kernel, scaling=scaling,
                             num_heads=num_heads, head_dim=head_dim)
    return pl.pallas_call(
        kern,
        out_shape=jax.ShapeDtypeStruct((T, B * E), q.dtype),
        grid=(B // GB,),
        in_specs=[
            pl.BlockSpec((T, GB, E), lambda b: (0, b, 0)),
            pl.BlockSpec((S, GB, E), lambda b: (0, b, 0)),
            pl.BlockSpec((S, GB, E), lambda b: (0, b, 0)),
            pl.BlockSpec((T, S), lambda b: (0, 0)),
        ],
        out_specs=pl.BlockSpec((T, GB * E), lambda b: (0, b)),
        scratch_shapes=[pltpu.VMEM((T, GB * E), jnp.float32)],
        compiler_params=pltpu.CompilerParams(dimension_semantics=("parallel",)),
    )(q, k, v, attn_mask)


# ---------------------------------------------------------------------------
# Module wrapper (parameter bookkeeping; reshapes are free row-major views)
# ---------------------------------------------------------------------------
class MultiheadAttentionPallas:
    def __init__(self, in_proj_weight, in_proj_bias, out_proj_weight, out_proj_bias,
                 embed_dim_in, head_dim, num_heads, attn_dropout=0.0):
        self.embed_dim_in = embed_dim_in
        self.embed_dim_out = embed_dim_in
        self.embed_dim = head_dim * num_heads
        self.num_heads = num_heads
        self.head_dim = head_dim
        self.attn_dropout = attn_dropout
        self.scaling = float(head_dim) ** (-0.5)
        E = self.embed_dim
        assert in_proj_weight.shape == (3 * E, embed_dim_in)
        assert out_proj_weight.shape == (self.embed_dim_out, E)

        # Originals (kept for the reference implementation).
        self.in_proj_weight = in_proj_weight
        self.in_proj_bias = in_proj_bias
        self.out_proj_weight = out_proj_weight
        self.out_proj_bias = out_proj_bias

        # Pre-transpose ONCE so the forward never materializes a weight copy.
        wt = jnp.transpose(in_proj_weight)                 # (E_in, 3E)
        self.wt_qkv, self.b_qkv = wt, in_proj_bias
        self.wt_q, self.b_q = wt[:, :E], in_proj_bias[:E]
        self.wt_k, self.b_k = wt[:, E:2 * E], in_proj_bias[E:2 * E]
        self.wt_v, self.b_v = wt[:, 2 * E:], in_proj_bias[2 * E:]
        self.wt_kv, self.b_kv = wt[:, E:], in_proj_bias[E:]
        self.wt_out, self.b_out = jnp.transpose(out_proj_weight), out_proj_bias

    def __call__(self, query, key, value, attn_mask=None):
        T, B, E_in = query.shape
        assert E_in == self.embed_dim_in
        E, H, D = self.embed_dim, self.num_heads, self.head_dim
        S = key.shape[0]
        mask = (attn_mask.astype(jnp.float32) if attn_mask is not None
                else jnp.zeros((T, S), jnp.float32))

        qkv_same = (query is key) and (key is value)
        kv_same = key is value

        if qkv_same:
            # Fused QKV projection: x read from HBM once, one wide (3E) matmul.
            qkv = pallas_linear(query.reshape(T * B, E_in), self.wt_qkv, self.b_qkv)
            qkv = qkv.reshape(T, B, 3 * E)                 # free row-major view
            attn = pallas_mha_fused(qkv, mask, scaling=self.scaling,
                                    num_heads=H, head_dim=D)           # (T, B*E)
        else:
            q = pallas_linear(query.reshape(T * B, E_in), self.wt_q, self.b_q)
            if kv_same:
                kv = pallas_linear(key.reshape(S * B, E_in), self.wt_kv, self.b_kv)
                k, v = kv[:, :E], kv[:, E:]
            else:
                k = pallas_linear(key.reshape(S * B, E_in), self.wt_k, self.b_k)
                v = pallas_linear(value.reshape(S * B, E_in), self.wt_v, self.b_v)
            attn = pallas_mha(q.reshape(T, B, E), k.reshape(S, B, E),
                              v.reshape(S, B, E), mask, scaling=self.scaling,
                              num_heads=H, head_dim=D)                  # (T, B*E)

        out = pallas_linear(attn.reshape(T * B, E), self.wt_out, self.b_out)
        return out.reshape(T, B, self.embed_dim_out)


# ---------------------------------------------------------------------------
# Pure-JAX reference (mirrors the torch forward) for correctness checking.
# ---------------------------------------------------------------------------
def reference_mha(query, key, value, attn_mask, mod: MultiheadAttentionPallas):
    T, B, _ = query.shape
    S = key.shape[0]
    E, H, D = mod.embed_dim, mod.num_heads, mod.head_dim
    W, bias = mod.in_proj_weight, mod.in_proj_bias
    q = query @ W[:E].T + bias[:E]
    k = key @ W[E:2 * E].T + bias[E:2 * E]
    v = value @ W[2 * E:].T + bias[2 * E:]
    q = q * mod.scaling
    q = q.reshape(T, B * H, D).transpose(1, 0, 2)
    k = k.reshape(S, B * H, D).transpose(1, 0, 2)
    v = v.reshape(S, B * H, D).transpose(1, 0, 2)
    logits = jnp.einsum("btd,bsd->bts", q, k)
    if attn_mask is not None:
        logits = logits + attn_mask[None]
    w = jax.nn.softmax(logits.astype(jnp.float32), axis=-1).astype(logits.dtype)
    attn = jnp.einsum("bts,bsd->btd", w, v)
    attn = attn.transpose(1, 0, 2).reshape(T, B, E)
    return attn @ mod.out_proj_weight.T + mod.out_proj_bias


if __name__ == "__main__":
    # Small, module-consistent shapes: (Time, Batch, Channel).
    tgt_len, bsz = 8, 2
    embed_dim_in = 32
    num_heads, head_dim = 4, 8
    embed_dim = num_heads * head_dim            # 32

    rng = jax.random.PRNGKey(0)
    k0, k1, k2, k3, k4, k5 = jax.random.split(rng, 6)

    in_proj_weight = 0.1 * jax.random.normal(k0, (3 * embed_dim, embed_dim_in), jnp.float32)
    in_proj_bias = 0.1 * jax.random.normal(k1, (3 * embed_dim,), jnp.float32)
    out_proj_weight = 0.1 * jax.random.normal(k2, (embed_dim_in, embed_dim), jnp.float32)
    out_proj_bias = 0.1 * jax.random.normal(k3, (embed_dim_in,), jnp.float32)

    mod = MultiheadAttentionPallas(in_proj_weight, in_proj_bias,
                                   out_proj_weight, out_proj_bias,
                                   embed_dim_in, head_dim, num_heads, attn_dropout=0.0)

    # --- self-attention (fused QKV path) with additive causal mask ---
    x = jax.random.normal(k4, (tgt_len, bsz, embed_dim_in), jnp.float32)
    causal = jnp.tril(jnp.ones((tgt_len, tgt_len), jnp.float32))
    attn_mask = jnp.where(causal > 0, 0.0, -1e9).astype(jnp.float32)

    out = jax.block_until_ready(mod(x, x, x, attn_mask))
    ref = reference_mha(x, x, x, attn_mask, mod)
    np.testing.assert_allclose(np.asarray(out), np.asarray(ref), rtol=1e-4, atol=1e-4)

    # --- cross-attention (key is value, src_len != tgt_len) path ---
    src_len = 16
    mem = jax.random.normal(k5, (src_len, bsz, embed_dim_in), jnp.float32)
    cross_mask = jnp.zeros((tgt_len, src_len), jnp.float32)
    out2 = jax.block_until_ready(mod(x, mem, mem, cross_mask))
    ref2 = reference_mha(x, mem, mem, cross_mask, mod)
    np.testing.assert_allclose(np.asarray(out2), np.asarray(ref2), rtol=1e-4, atol=1e-4)

    print("KERNEL_OK")
</pallas_src>

<mosaic_0001>
module attributes {stable_mosaic.version = 11 : i64} {
  func.func @_linear_kernel(%arg0: i32, %arg1: i32, %arg2: i32, %arg3: memref<16x32xf32, #tpu.memory_space<vmem>>, %arg4: memref<32x96xf32, #tpu.memory_space<vmem>>, %arg5: memref<1x96xf32, #tpu.memory_space<vmem>>, %arg6: memref<16x96xf32, #tpu.memory_space<vmem>>, %arg7: memref<16x96xf32, #tpu.memory_space<vmem>>) attributes {dimension_semantics = [#tpu.dimension_semantics<parallel>, #tpu.dimension_semantics<parallel>, #tpu.dimension_semantics<arbitrary>], iteration_bounds = array<i64: 1, 1, 1>, scalar_prefetch = 0 : i64, scratch_operands = 1 : i64, tpu.core_type = #tpu.core_type<tc>, window_params = [{transform_indices = @transform_0, window_bounds = array<i64: 16, 32>}, {transform_indices = @transform_1, window_bounds = array<i64: 32, 96>}, {transform_indices = @transform_2, window_bounds = array<i64: 1, 96>}, {transform_indices = @transform_3, window_bounds = array<i64: 16, 96>}]} {
    %c0_i32 = arith.constant 0 : i32
    %0 = arith.cmpi eq, %arg2, %c0_i32 : i32
    %1 = arith.extui %0 : i1 to i32
    %c0_i32_0 = arith.constant 0 : i32
    %2 = arith.cmpi ne, %1, %c0_i32_0 : i32
    scf.if %2 {
      %cst_10 = arith.constant 0.000000e+00 : f32
      %12 = vector.broadcast %cst_10 : f32 to vector<16x96xf32>
      %c0_11 = arith.constant 0 : index
      %c0_12 = arith.constant 0 : index
      %13 = vector.load %arg7[%c0_11, %c0_12] : memref<16x96xf32, #tpu.memory_space<vmem>>, vector<16x96xf32>
      tpu.vector_store %arg7[%c0_11, %c0_12], %12 {strides = array<i32>} : memref<16x96xf32, #tpu.memory_space<vmem>>, vector<16x96xf32>,
    } else {
    }
    %c0 = arith.constant 0 : index
    %c0_1 = arith.constant 0 : index
    %3 = vector.load %arg7[%c0, %c0_1] : memref<16x96xf32, #tpu.memory_space<vmem>>, vector<16x96xf32>
    %c0_2 = arith.constant 0 : index
    %c0_3 = arith.constant 0 : index
    %4 = vector.load %arg3[%c0_2, %c0_3] : memref<16x32xf32, #tpu.memory_space<vmem>>, vector<16x32xf32>
    %c0_4 = arith.constant 0 : index
    %c0_5 = arith.constant 0 : index
    %5 = vector.load %arg4[%c0_4, %c0_5] : memref<32x96xf32, #tpu.memory_space<vmem>>, vector<32x96xf32>
    %cst = arith.constant dense<0.000000e+00> : vector<16x96xf32>
    %6 = tpu.matmul %4, %5, %cst {dimension_numbers = #tpu.dot_dimension_numbers<[1], [0], [0], [1], [0, 0, 1, 1], [], []>} : vector<16x32xf32>, vector<32x96xf32>, vector<16x96xf32> -> vector<16x96xf32>
    %7 = arith.addf %3, %6 : vector<16x96xf32>
    %c0_6 = arith.constant 0 : index
    %c0_7 = arith.constant 0 : index
    %8 = vector.load %arg7[%c0_6, %c0_7] : memref<16x96xf32, #tpu.memory_space<vmem>>, vector<16x96xf32>
    tpu.vector_store %arg7[%c0_6, %c0_7], %7 {strides = array<i32>} : memref<16x96xf32, #tpu.memory_space<vmem>>, vector<16x96xf32>,
    %c0_i32_8 = arith.constant 0 : i32
    %9 = arith.cmpi eq, %arg2, %c0_i32_8 : i32
    %10 = arith.extui %9 : i1 to i32
    %c0_i32_9 = arith.constant 0 : i32
    %11 = arith.cmpi ne, %10, %c0_i32_9 : i32
    scf.if %11 {
      %c0_10 = arith.constant 0 : index
      %c0_11 = arith.constant 0 : index
      %12 = vector.load %arg7[%c0_10, %c0_11] : memref<16x96xf32, #tpu.memory_space<vmem>>, vector<16x96xf32>
      %c0_12 = arith.constant 0 : index
      %c0_13 = arith.constant 0 : index
      %13 = vector.load %arg5[%c0_12, %c0_13] : memref<1x96xf32, #tpu.memory_space<vmem>>, vector<1x96xf32>
      %14 = vector.broadcast %13 : vector<1x96xf32> to vector<16x96xf32>
      %15 = arith.addf %12, %14 : vector<16x96xf32>
      %c0_14 = arith.constant 0 : index
      %c0_15 = arith.constant 0 : index
      %16 = vector.load %arg6[%c0_14, %c0_15] : memref<16x96xf32, #tpu.memory_space<vmem>>, vector<16x96xf32>
      tpu.vector_store %arg6[%c0_14, %c0_15], %15 {strides = array<i32>} : memref<16x96xf32, #tpu.memory_space<vmem>>, vector<16x96xf32>,
    } else {
    }
    return
  }
  func.func @transform_0(%arg0: i32, %arg1: i32, %arg2: i32) -> (i32, i32) {
    %c0_i32 = arith.constant 0 : i32
    return %arg0, %arg2 : i32, i32
  }
  func.func @transform_1(%arg0: i32, %arg1: i32, %arg2: i32) -> (i32, i32) {
    %c0_i32 = arith.constant 0 : i32
    return %arg2, %arg1 : i32, i32
  }
  func.func @transform_2(%arg0: i32, %arg1: i32, %arg2: i32) -> (i32, i32) {
    %c0_i32 = arith.constant 0 : i32
    %c0_i32_0 = arith.constant 0 : i32
    return %c0_i32, %arg1 : i32, i32
  }
  func.func @transform_3(%arg0: i32, %arg1: i32, %arg2: i32) -> (i32, i32) {
    %c0_i32 = arith.constant 0 : i32
    return %arg0, %arg1 : i32, i32
  }
}

</mosaic_0001>

<llo_original>
// kernel: tpu_custom_call.1
$region0: #{tpu_custom_call.1}
  #allocation0 [shape = 'u32[]', space=smem, size = 0x4, offset = 0x4, fixed_abs, tag = 'smem constant byte address 0x4 - core index']
  #allocation1 [shape = 'u32[72,128]{1,0:T(1,128)}', space=vmem, size = 0x9000, scoped, tag = 'internal scratch']
  #allocation2 [shape = 'f32[16,96]{1,0:T(8,128)}', space=vmem, size = 0x2000, scoped, tag = 'scratch operand']
  %s0 = inlined_call_operand.hbm [shape: f32[16,32], index: 0, kind: input, shape index: {}]
  %s1 = inlined_call_operand.hbm [shape: f32[32,96], index: 1, kind: input, shape index: {}]
  %s2 = inlined_call_operand.vmem [shape: f32[1,96], index: 2, kind: input, shape index: {}]
  %s3 = inlined_call_operand.hbm [shape: f32[16,96], index: 3, kind: output, shape index: {}]
  %s4 = sld [smem:[#allocation0]]
  $region38: #{tpu_custom_call.1} parent=0
    _
  %s6 = ssub.s32 1, %s4
  %s7 = scalar_select 0, %s6, %s4
  $region1: #{tpu_custom_call.1} parent=0
    #allocation3 [shape = 'u8[8192]{0}', space=vmem, size = 0x2000, scoped, tag = 'input window, operand 0, single buffered']
    #allocation4 [shape = 's32[1]{0}', space=sflag, size = 0x4, scoped, tag = 'scoped memory for tpu_custom_call.1']
    #allocation5 [shape = 's32[1]{0}', space=sflag, size = 0x4, scoped, tag = 'scoped memory for tpu_custom_call.1']
    #allocation6 [shape = 'u8[16384]{0}', space=vmem, size = 0x4000, scoped, tag = 'input window, operand 1, single buffered']
    #allocation7 [shape = 's32[1]{0}', space=sflag, size = 0x4, scoped, tag = 'scoped memory for tpu_custom_call.1']
    #allocation8 [shape = 'u8[8192]{0}', space=vmem, size = 0x2000, scoped, tag = 'output window, operand 0, single buffered']
    %8 = vsyncpa [#allocation4], 0
    %9 = vsyncpa [#allocation7], 0
    %10 = vsyncpa [#allocation5], 0
    // Predicated region
    $region2: #{tpu_custom_call.1} parent=1 // pred_check
      _
    $region3: #{tpu_custom_call.1} parent=1 // pred_check_branch
      %12 = sbr.rel (0) target = $region5
    $region4: #{tpu_custom_call.1} parent=1 // pred_region
      %14 = vsyncadd [#allocation4], 0
      %s15 = sshll.u32 %s0, 4
      %s16 = int_to_ptr.hbm [resolvable:$true] %s15
      %s17 = sshll.u32 [#allocation3], 4
      %s18 = int_to_ptr.vmem [resolvable:$true] %s17
      %23 = dma.hbm_to_vmem [thread:$0]  %s16, 256, %s18, [#allocation4], 128, 128, 8
    $region5: #{tpu_custom_call.1} parent=1 // pred_fallthru
      _
    // Predicated region
    $region6: #{tpu_custom_call.1} parent=1 // pred_check
      _
    $region7: #{tpu_custom_call.1} parent=1 // pred_check_branch
      %25 = sbr.rel (0) target = $region9
    $region8: #{tpu_custom_call.1} parent=1 // pred_region
      %27 = vsyncadd [#allocation7], 0
      %s28 = sshll.u32 %s1, 4
      %s29 = int_to_ptr.hbm [resolvable:$true] %s28
      %s30 = sshll.u32 [#allocation6], 4
      %s31 = int_to_ptr.vmem [resolvable:$true] %s30
      %36 = dma.hbm_to_vmem [thread:$0]  %s29, 512, %s31, [#allocation7], 128, 128, 8
    $region9: #{tpu_custom_call.1} parent=1 // pred_fallthru
      _
    // Predicated region
    $region10: #{tpu_custom_call.1} parent=1 // pred_check
      _
    $region11: #{tpu_custom_call.1} parent=1 // pred_check_branch
      %38 = sbr.rel (0) target = $region13
    $region12: #{tpu_custom_call.1} parent=1 // pred_region
      _
    $region13: #{tpu_custom_call.1} parent=1 // pred_fallthru
      _
    // Predicated region
    $region14: #{tpu_custom_call.1} parent=1 // pred_check
      _
    $region15: #{tpu_custom_call.1} parent=1 // pred_check_branch
      %40 = sbr.rel (0) target = $region17
    $region16: #{tpu_custom_call.1} parent=1 // pred_region
      %42 = dma.done [#allocation4], 256
    $region17: #{tpu_custom_call.1} parent=1 // pred_fallthru
      _
    // Predicated region
    $region18: #{tpu_custom_call.1} parent=1 // pred_check
      _
    $region19: #{tpu_custom_call.1} parent=1 // pred_check_branch
      %44 = sbr.rel (0) target = $region21
    $region20: #{tpu_custom_call.1} parent=1 // pred_region
      %46 = dma.done [#allocation7], 512
    $region21: #{tpu_custom_call.1} parent=1 // pred_fallthru
      _
    %p47 = scmp.eq.s32.totalorder 0, 0
    // Predicated region
    $region22: #{tpu_custom_call.1} parent=1 // pred_check
      %p48 = pneg %p47
    $region23: #{tpu_custom_call.1} parent=1 // pred_check_branch
      %50 = sbr.rel (%p48) target = $region25
    $region24: #{tpu_custom_call.1} parent=1 // pred_region
      %vm51 = vcmask 785408
      %52 = vst.msk [vmem:[#allocation2] sm:$0xff] %vm51, 0.0
      %53 = vst.msk [vmem:[#allocation2 + $0x8] sm:$0xff] %vm51, 0.0
    $region25: #{tpu_custom_call.1} parent=1 // pred_fallthru
      _
    %v54 = vld [vmem:[#allocation2] sm:$0xff]
    %v55 = vld [vmem:[#allocation2 + $0x8] sm:$0xff]
    %v56 = vld [vmem:[#allocation3] sm:$0xff]
    %v57 = vld [vmem:[#allocation3 + $0x8] sm:$0xff]
    %v58 = vld [vmem:[#allocation6] sm:$0xff]
    %v59 = vld [vmem:[#allocation6 + $0x8] sm:$0xff]
    %v60 = vld [vmem:[#allocation6 + $0x10] sm:$0xff]
    %v61 = vld [vmem:[#allocation6 + $0x18] sm:$0xff]
    %vm62 = vcmask 261120
    %v64 = vsel %vm62, %v56, 0
    %v67 = vsel %vm62, %v57, 0
    %69 = vmatpush.msra.mxu0 0.0
    %70 = vmatpush.msra.mxu0 0.0
    %71 = vmatpush.msra.mxu0 0.0
    %72 = vmatpush.msra.mxu0 0.0
    %73 = vmatpush.msra.mxu0 0.0
    %74 = vmatpush.msra.mxu0 0.0
    %75 = vmatpush.msra.mxu0 0.0
    %76 = vmatpush.msra.mxu0 0.0
    %77 = vmatpush.msra.mxu0 0.0
    %78 = vmatpush.msra.mxu0 0.0
    %79 = vmatpush.msra.mxu0 0.0
    %80 = vmatpush.msra.mxu0 0.0
    %81 = vmatpush.msra.mxu0 %v61
    %82 = vmatpush.msra.mxu0 %v60
    %83 = vmatpush.msra.mxu0 %v59
    %84 = vmatpush.msra.mxu0 %v58
    %85 = vmatmul.f32.gmra.mxu0 %v64
    %v86 = vpop.f32.mrf.mxu0
    %v87 = vadd.f32 0.0, %v86
    %88 = vmatmul.f32.gmra.mxu0 %v67
    %v89 = vpop.f32.mrf.mxu0
    %v90 = vadd.f32 0.0, %v89
    %91 = vdwg.mxu0
    %v92 = vadd.f32 %v54, %v87
    %v93 = vadd.f32 %v55, %v90
    %vm94 = vcmask 785408
    %95 = vst.msk [vmem:[#allocation2] sm:$0xff] %vm94, %v92
    %96 = vst.msk [vmem:[#allocation2 + $0x8] sm:$0xff] %vm94, %v93
    // Predicated region
    $region26: #{tpu_custom_call.1} parent=1 // pred_check
      %p97 = pneg %p47
    $region27: #{tpu_custom_call.1} parent=1 // pred_check_branch
      %99 = sbr.rel (%p97) target = $region29
    $region28: #{tpu_custom_call.1} parent=1 // pred_region
      %v100 = vld [vmem:[#allocation2] sm:$0xff]
      %v101 = vld [vmem:[#allocation2 + $0x8] sm:$0xff]
      %v102 = vld [vmem:[%s2] sm:$0x1]
      %v104 = vperm.slane %v102, 0
      %v106 = vadd.f32 %v100, %v104
      %v107 = vadd.f32 %v101, %v104
      %108 = vst.msk [vmem:[#allocation8] sm:$0xff] %vm94, %v106
      %109 = vst.msk [vmem:[#allocation8 + $0x8] sm:$0xff] %vm94, %v107
    $region29: #{tpu_custom_call.1} parent=1 // pred_fallthru
      _
    // Predicated region
    $region30: #{tpu_custom_call.1} parent=1 // pred_check
      _
    $region31: #{tpu_custom_call.1} parent=1 // pred_check_branch
      %111 = sbr.rel (0) target = $region33
    $region32: #{tpu_custom_call.1} parent=1 // pred_region
      %113 = vsyncadd [#allocation5], 0
      %s114 = sshll.u32 [#allocation8], 4
      %s115 = int_to_ptr.vmem [resolvable:$true] %s114
      %s116 = sshll.u32 %s3, 4
      %s117 = int_to_ptr.hbm [resolvable:$true] %s116
      %122 = dma.vmem_to_hbm [thread:$0]  %s115, 256, %s117, [#allocation5], 128, 128, 8
    $region33: #{tpu_custom_call.1} parent=1 // pred_fallthru
      _
    // Predicated region
    $region34: #{tpu_custom_call.1} parent=1 // pred_check
      _
    $region35: #{tpu_custom_call.1} parent=1 // pred_check_branch
      %124 = sbr.rel (0) target = $region37
    $region36: #{tpu_custom_call.1} parent=1 // pred_region
      %126 = dma.done [#allocation5], 256
    $region37: #{tpu_custom_call.1} parent=1 // pred_fallthru
      _
    %127 = vsyncpa [#allocation4], 1
    %128 = vsyncpa [#allocation7], 1
    %129 = vsyncpa [#allocation5], 1

</llo_original>
